<compile_context>
chip_gen: v6e
topology: v6e:2x2x1
jax: 0.10.0
libtpu: 0.0.40
codegen_flags: <defaults>
</compile_context>

<pallas_src>
import functools
import math

import jax
import jax.numpy as jnp
from jax import lax
from jax.experimental import pallas as pl
from jax.experimental.pallas import tpu as pltpu


def _round_up(x, m):
    return ((x + m - 1) // m) * m


def _vmem_capacity_bytes():
    # Runtime query first; then sniff device_kind; last resort assume the
    # 128 MiB of v5e/v6e (do NOT halve TM on 128 MiB parts by default).
    try:
        return int(pltpu.get_tpu_info().vmem_capacity_bytes)
    except Exception:
        pass
    try:
        kind = jax.devices()[0].device_kind.lower()
        if "v7" in kind:
            return 64 * 1024 * 1024
    except Exception:
        pass
    return 128 * 1024 * 1024


def _lowrank_kernel(x_ref, a_ref, bt_ref, o_ref, *, scaling):
    # x_ref: [TM, K], a_ref: [r, K], bt_ref: [r, TN], o_ref: [TM, TN]
    x = x_ref[...]
    # [TM, r] = x @ A.T  (contract K of x with K of A; no transpose materialized)
    xa = lax.dot_general(x, a_ref[...], (((1,), (1,)), ((), ())),
                         preferred_element_type=jnp.float32)
    # Scale the tiny [TM, r] intermediate (TM*r VPU ops instead of TM*TN) and cast
    # back to the input dtype so the second matmul stays on the native MXU path.
    xa = (xa * scaling).astype(x.dtype)
    # [TM, TN] = xa @ B.T with B.T pre-transposed to the canonical [K, N] rhs.
    # preferred_element_type = output dtype avoids an un-budgeted f32 [TM, TN] temp
    # (hardware accumulation is still f32; r <= 128 is a single MXU pass).
    o_ref[...] = lax.dot_general(xa, bt_ref[...], (((1,), (0,)), ((), ())),
                                 preferred_element_type=o_ref.dtype)


def lowrank_linear(x, lora_A, lora_B, *, lora_alpha=16, block_m=None, block_n=None,
                   compute_dtype=None):
    """x: [..., in_features] -> [..., out_features], LoRA forward pass.

    compute_dtype: optionally stream x / the output in a narrower dtype (e.g.
    jnp.bfloat16) to halve HBM bytes; accumulation stays f32 on the MXU.
    Default None keeps the input dtype (original module semantics).
    """
    r = lora_A.shape[0]
    scaling = lora_alpha / r
    K = x.shape[-1]
    N = lora_B.shape[0]
    assert lora_A.shape == (r, K)
    assert lora_B.shape == (N, r)
    # TODO(synk): lora_dropout > 0 (training-time nn.Dropout) not implemented; the
    # module default (0.0) is the identity, which is what this kernel computes.

    lead = x.shape[:-1]
    x2d = x.reshape(-1, K)
    if compute_dtype is not None:
        x2d = x2d.astype(compute_dtype)
    M = x2d.shape[0]
    dtype = x2d.dtype
    itemsize = jnp.dtype(dtype).itemsize

    # Weights: tiny -> one-time transpose/cast in the wrapper is negligible.
    a = lora_A.astype(dtype)                      # [r, K]   (8 sublanes, lane-dense)
    b_t = jnp.transpose(lora_B).astype(dtype)     # [r, N]   canonical MXU [K, N] rhs

    # --- N tiling: lane-dense 128-multiples when possible, else full extent ---
    if block_n is not None:
        tn = int(block_n)
    elif N % 128 == 0:
        tn = min(N, 2048)
    else:
        tn = N            # full-extent last dim (masked vst on the edge lanes)
    tn = min(tn, N)
    grid_n = pl.cdiv(N, tn)

    # --- VMEM-aware tile size over M ---
    vmem_cap = _vmem_capacity_bytes()
    weight_bytes = 2 * (r * K + r * tn) * itemsize      # residents (double-buffered)
    per_row = 2 * (K + tn) * itemsize                   # double-buffered x + out rows
    budget = int(0.55 * vmem_cap) - weight_bytes
    if block_m is not None:
        tm = int(block_m)
    else:
        tm = max(budget // per_row, 8)
        tm = min(int(tm), 2048)
        # Keep >= ~4 grid steps along M so both v7x TensorCores get work and the
        # DMA pipeline has enough steps to hide prologue/epilogue (~0.35us/step).
        tm = min(tm, max(8, _round_up(pl.cdiv(M, 4), 8)))
    tm = min(tm, _round_up(M, 8))
    tm = max(8, (tm // 8) * 8)
    grid_m = pl.cdiv(M, tm)

    needed = 2 * tm * (K + tn) * itemsize + weight_bytes + (4 << 20)
    vmem_limit = int(min(0.85 * vmem_cap, max(needed, 32 * 1024 * 1024)))

    cost = pl.CostEstimate(
        flops=2 * M * r * (K + N),
        transcendentals=0,
        bytes_accessed=(M * K + M * N + r * K + N * r) * itemsize,
    )

    kernel = functools.partial(_lowrank_kernel, scaling=scaling)
    out2d = pl.pallas_call(
        kernel,
        out_shape=jax.ShapeDtypeStruct((M, N), dtype),
        grid_spec=pl.GridSpec(
            grid=(grid_m, grid_n),                               # N fastest
            in_specs=[
                pl.BlockSpec((tm, K), lambda i, j: (i, 0)),      # x: constant in j
                pl.BlockSpec((r, K), lambda i, j: (0, 0)),       # lora_A: resident
                pl.BlockSpec((r, tn), lambda i, j: (0, j)),      # B.T: [r, TN] tiles
            ],
            out_specs=pl.BlockSpec((tm, tn), lambda i, j: (i, j)),
        ),
        compiler_params=pltpu.CompilerParams(
            dimension_semantics=("parallel", "parallel"),        # shards across TCs
            vmem_limit_bytes=vmem_limit,
        ),
        cost_estimate=cost,
    )(x2d, a, b_t)

    return out2d.reshape(lead + (N,))


def init_params(key, in_features, out_features, r):
    """Deterministic init matching the module's __init__:
       lora_A ~ kaiming_uniform_(a=sqrt(5))  =>  U(-1/sqrt(fan_in), 1/sqrt(fan_in))
       lora_B = zeros
    """
    bound = 1.0 / math.sqrt(in_features)
    lora_A = jax.random.uniform(key, (r, in_features), jnp.float32,
                                minval=-bound, maxval=bound)
    lora_B = jnp.zeros((out_features, r), jnp.float32)
    return lora_A, lora_B


if __name__ == "__main__":
    key = jax.random.PRNGKey(0)
    kx, ka, kb, kx2, ka2, kb2 = jax.random.split(key, 6)

    # --- Small config matching the module defaults (r=8, alpha=16, dropout=0) ---
    batch, seq, in_features, out_features, r, lora_alpha = 2, 8, 32, 32, 8, 16
    x = jax.random.normal(kx, (batch, seq, in_features), jnp.float32)

    # Faithful module init (lora_B = 0  =>  output is exactly zero, as in PyTorch).
    lora_A, lora_B = init_params(ka, in_features, out_features, r)
    out = lowrank_linear(x, lora_A, lora_B, lora_alpha=lora_alpha)
    jax.block_until_ready(out)
    ref = (x @ lora_A.T @ lora_B.T) * (lora_alpha / r)
    assert out.shape == ref.shape
    assert jnp.allclose(out, ref, atol=1e-5), "mismatch vs reference (zero-B)"

    # Nonzero B so the full matmul path (unaligned K/N, full-extent blocks) runs.
    lora_B_nz = jax.random.normal(kb, (out_features, r), jnp.float32) * 0.02
    out_nz = lowrank_linear(x, lora_A, lora_B_nz, lora_alpha=lora_alpha)
    jax.block_until_ready(out_nz)
    ref_nz = (x @ lora_A.T @ lora_B_nz.T) * (lora_alpha / r)
    assert jnp.allclose(out_nz, ref_nz, atol=1e-4), "mismatch vs reference (nonzero-B)"

    # Lane-aligned shapes + 2-D grid: partial final M tile (M = 15, block_m=8 ->
    # grid_m=2) and tiled N (N=256, block_n=128 -> grid_n=2, x reused across j).
    K2, N2 = 128, 256
    x2 = jax.random.normal(kx2, (3, 5, K2), jnp.float32)
    A2 = jax.random.normal(ka2, (r, K2), jnp.float32) * (1.0 / math.sqrt(K2))
    B2 = jax.random.normal(kb2, (N2, r), jnp.float32) * 0.02
    out2 = lowrank_linear(x2, A2, B2, lora_alpha=lora_alpha, block_m=8, block_n=128)
    jax.block_until_ready(out2)
    ref2 = (x2 @ A2.T @ B2.T) * (lora_alpha / r)
    assert jnp.allclose(out2, ref2, atol=2e-4), "mismatch vs reference (tiled M,N)"

    print("KERNEL_OK")
</pallas_src>

<mosaic_0001>
module attributes {stable_mosaic.version = 11 : i64} {
  func.func @_lowrank_kernel(%arg0: i32, %arg1: i32, %arg2: memref<8x32xf32, #tpu.memory_space<vmem>>, %arg3: memref<8x32xf32, #tpu.memory_space<vmem>>, %arg4: memref<8x32xf32, #tpu.memory_space<vmem>>, %arg5: memref<8x32xf32, #tpu.memory_space<vmem>>) attributes {dimension_semantics = [#tpu.dimension_semantics<parallel>, #tpu.dimension_semantics<parallel>], iteration_bounds = array<i64: 2, 1>, scalar_prefetch = 0 : i64, scratch_operands = 0 : i64, tpu.core_type = #tpu.core_type<tc>, window_params = [{transform_indices = @transform_0, window_bounds = array<i64: 8, 32>}, {pipeline_mode = #tpu.pipeline_mode<synchronous>, transform_indices = @transform_1, window_bounds = array<i64: 8, 32>}, {transform_indices = @transform_2, window_bounds = array<i64: 8, 32>}, {transform_indices = @transform_3, window_bounds = array<i64: 8, 32>}]} {
    %c0 = arith.constant 0 : index
    %c0_0 = arith.constant 0 : index
    %0 = vector.load %arg2[%c0, %c0_0] : memref<8x32xf32, #tpu.memory_space<vmem>>, vector<8x32xf32>
    %c0_1 = arith.constant 0 : index
    %c0_2 = arith.constant 0 : index
    %1 = vector.load %arg3[%c0_1, %c0_2] : memref<8x32xf32, #tpu.memory_space<vmem>>, vector<8x32xf32>
    %cst = arith.constant dense<0.000000e+00> : vector<8x8xf32>
    %2 = tpu.matmul %0, %1, %cst {dimension_numbers = #tpu.dot_dimension_numbers<[1], [1], [0], [0], [0, 0, 1, 0], [], []>} : vector<8x32xf32>, vector<8x32xf32>, vector<8x8xf32> -> vector<8x8xf32>
    %cst_3 = arith.constant 2.000000e+00 : f32
    %3 = vector.broadcast %cst_3 : f32 to vector<8x8xf32>
    %4 = arith.mulf %2, %3 : vector<8x8xf32>
    %c0_4 = arith.constant 0 : index
    %c0_5 = arith.constant 0 : index
    %5 = vector.load %arg4[%c0_4, %c0_5] : memref<8x32xf32, #tpu.memory_space<vmem>>, vector<8x32xf32>
    %cst_6 = arith.constant dense<0.000000e+00> : vector<8x32xf32>
    %6 = tpu.matmul %4, %5, %cst_6 {dimension_numbers = #tpu.dot_dimension_numbers<[1], [0], [0], [1], [0, 0, 1, 1], [], []>} : vector<8x8xf32>, vector<8x32xf32>, vector<8x32xf32> -> vector<8x32xf32>
    %c0_7 = arith.constant 0 : index
    %c0_8 = arith.constant 0 : index
    %7 = vector.load %arg5[%c0_7, %c0_8] : memref<8x32xf32, #tpu.memory_space<vmem>>, vector<8x32xf32>
    tpu.vector_store %arg5[%c0_7, %c0_8], %6 {strides = array<i32>} : memref<8x32xf32, #tpu.memory_space<vmem>>, vector<8x32xf32>,
    return
  }
  func.func @transform_0(%arg0: i32, %arg1: i32) -> (i32, i32) {
    %c0_i32 = arith.constant 0 : i32
    %c0_i32_0 = arith.constant 0 : i32
    return %arg0, %c0_i32 : i32, i32
  }
  func.func @transform_1(%arg0: i32, %arg1: i32) -> (i32, i32) {
    %c0_i32 = arith.constant 0 : i32
    %c0_i32_0 = arith.constant 0 : i32
    %c0_i32_1 = arith.constant 0 : i32
    return %c0_i32, %c0_i32_0 : i32, i32
  }
  func.func @transform_2(%arg0: i32, %arg1: i32) -> (i32, i32) {
    %c0_i32 = arith.constant 0 : i32
    %c0_i32_0 = arith.constant 0 : i32
    return %c0_i32, %arg1 : i32, i32
  }
  func.func @transform_3(%arg0: i32, %arg1: i32) -> (i32, i32) {
    %c0_i32 = arith.constant 0 : i32
    return %arg0, %arg1 : i32, i32
  }
}

</mosaic_0001>

<llo_original>
// kernel: tpu_custom_call.1
$region0: #{tpu_custom_call.1}
  #allocation0 [shape = 'u32[]', space=smem, size = 0x4, offset = 0x4, fixed_abs, tag = 'smem constant byte address 0x4 - core index']
  #allocation1 [shape = 'u32[144,128]{1,0:T(1,128)}', space=vmem, size = 0x12000, scoped, tag = 'internal scratch']
  %s0 = inlined_call_operand.hbm [shape: f32[16,32], index: 0, kind: input, shape index: {}]
  %s1 = inlined_call_operand.hbm [shape: f32[8,32], index: 1, kind: input, shape index: {}]
  %s2 = inlined_call_operand.hbm [shape: f32[8,32], index: 2, kind: input, shape index: {}]
  %s3 = inlined_call_operand.hbm [shape: f32[16,32], index: 3, kind: output, shape index: {}]
  %s4 = sld [smem:[#allocation0]]
  $region57: #{tpu_custom_call.1} parent=0
    _
  %s6 = ssub.s32 1, %s4
  %s7 = scalar_select 0, %s6, %s4
  $region1: #{tpu_custom_call.1} parent=0
    #allocation2 [shape = 'u8[8192]{0}', space=vmem, size = 0x2000, scoped, tag = 'input window, operand 0']
    #allocation3 [shape = 's32[2]{0}', space=sflag, size = 0x8, scoped, tag = 'scoped memory for tpu_custom_call.1']
    #allocation4 [shape = 's32[2]{0}', space=sflag, size = 0x8, scoped, tag = 'scoped memory for tpu_custom_call.1']
    #allocation5 [shape = 'u8[4096]{0}', space=vmem, size = 0x1000, scoped, tag = 'input window, operand 1, single buffered']
    #allocation6 [shape = 's32[1]{0}', space=sflag, size = 0x4, scoped, tag = 'scoped memory for tpu_custom_call.1']
    #allocation7 [shape = 'u8[4096]{0}', space=vmem, size = 0x1000, scoped, tag = 'input window, operand 2, single buffered']
    #allocation8 [shape = 'u8[8192]{0}', space=vmem, size = 0x2000, scoped, tag = 'output window, operand 0']
    %8 = vsyncpa [#allocation3], 0
    %s9 = scalar_lea.sflag [#allocation3], 1
    %10 = vsyncpa %s9, 0
    %11 = vsyncpa [#allocation6], 0
    %12 = vsyncpa [#allocation4], 0
    %s13 = scalar_lea.sflag [#allocation4], 1
    %14 = vsyncpa %s13, 0
    loop: start=0, step=1, limit=4
    $region2: #{tpu_custom_call.1} parent=1 // loop_pre_header
      _
    $region3: #{tpu_custom_call.1} parent=1 // loop_header
      %s16 = sphi 0, %s20
      %p17 = scmp.ge.s32.totalorder %s16, 4
      %s23 = sphi 0, %s35
      %s24 = sphi 0, %s31
      %s25 = sphi 0, %s23
      %s26 = sphi 0, %s24
      %s27 = sphi 0, %s25
      %s28 = sphi 0, %s26
      %s38 = sphi 0, %s40
      %s41 = sphi 0, %s38
      %s42 = sphi 0, %s41
      %s58 = sphi 0, %s42
      %s62 = sphi 0, %s62
      %s64 = sphi 0, %s62
      %s65 = sphi 0, %s64
      %s79 = sphi 0, %s65
      %s85 = sphi 0, %s87
      %s88 = sphi 0, %s85
      %s89 = sphi 0, %s88
      %s105 = sphi 0, %s89
      %s113 = sphi 0, %s115
      %s116 = sphi 0, %s113
      %s117 = sphi 0, %s116
      %s133 = sphi 0, %s117
    $region4: #{tpu_custom_call.1} parent=1 // loop_header_branch
      %19 = sbr.rel (%p17) target = $region8
    $region5: #{tpu_custom_call.1} parent=1 // loop_body
      %s21 = ssub.s32 %s16, 1
      %s22 = ssub.s32 %s16, 2
      %s29 = sadd.s32 1, %s24
      %p30 = scmp.ge.s32.totalorder %s29, 1
      %s31 = scalar_select %p30, 0, %s29
      %s32 = sadd.s32 1, %s23
      %s33 = scalar_select %p30, %s32, %s23
      %p34 = scmp.ge.s32.totalorder %s33, 2
      %s35 = scalar_select %p34, 0, %s33
      %s36 = ssub.s32 %s23, %s35
      %p37 = scmp.eq.s32.totalorder %s36, 0
      %s39 = sadd.s32 %s38, 1
      %s40 = scalar_select %p37, %s38, %s39
      %p43 = pneg %p37
      %p44 = scmp.eq.s32.totalorder %s16, 1
      %p45 = por %p43, %p44
      %p46 = scmp.ne.s32.totalorder %s38, %s41
      %p47 = scmp.eq.s32.totalorder %s16, 0
      %p48 = por %p46, %p47
      %p49 = scmp.ne.s32.totalorder %s38, %s41
      %p50 = scmp.eq.s32.totalorder %s21, 1
      %p51 = por %p49, %p50
      %p52 = scmp.ne.s32.totalorder %s41, %s42
      %p53 = scmp.eq.s32.totalorder %s21, 0
      %p54 = por %p52, %p53
      %p55 = scmp.ne.s32.totalorder %s41, %s42
      %p56 = scmp.eq.s32.totalorder %s22, 1
      %p57 = por %p55, %p56
      %p59 = scmp.ne.s32.totalorder %s42, %s58
      %p60 = scmp.eq.s32.totalorder %s22, 0
      %p61 = por %p59, %p60
      %s63 = sadd.s32 %s62, 1
      %p66 = scmp.eq.s32.totalorder %s16, 1
      %p67 = scmp.ne.s32.totalorder %s62, %s64
      %p68 = scmp.eq.s32.totalorder %s16, 0
      %p69 = por %p67, %p68
      %p70 = scmp.ne.s32.totalorder %s62, %s64
      %p71 = scmp.eq.s32.totalorder %s21, 1
      %p72 = por %p70, %p71
      %p73 = scmp.ne.s32.totalorder %s64, %s65
      %p74 = scmp.eq.s32.totalorder %s21, 0
      %p75 = por %p73, %p74
      %p76 = scmp.ne.s32.totalorder %s64, %s65
      %p77 = scmp.eq.s32.totalorder %s22, 1
      %p78 = por %p76, %p77
      %p80 = scmp.ne.s32.totalorder %s65, %s79
      %p81 = scmp.eq.s32.totalorder %s22, 0
      %p82 = por %p80, %p81
      %s83 = ssub.s32 %s24, %s31
      %p84 = scmp.eq.s32.totalorder %s83, 0
      %s86 = sadd.s32 %s85, 1
      %s87 = scalar_select %p84, %s85, %s86
      %p90 = pneg %p84
      %p91 = scmp.eq.s32.totalorder %s16, 1
      %p92 = por %p90, %p91
      %p93 = scmp.ne.s32.totalorder %s85, %s88
      %p94 = scmp.eq.s32.totalorder %s16, 0
      %p95 = por %p93, %p94
      %p96 = scmp.ne.s32.totalorder %s85, %s88
      %p97 = scmp.eq.s32.totalorder %s21, 1
      %p98 = por %p96, %p97
      %p99 = scmp.ne.s32.totalorder %s88, %s89
      %p100 = scmp.eq.s32.totalorder %s21, 0
      %p101 = por %p99, %p100
      %p102 = scmp.ne.s32.totalorder %s88, %s89
      %p103 = scmp.eq.s32.totalorder %s22, 1
      %p104 = por %p102, %p103
      %p106 = scmp.ne.s32.totalorder %s89, %s105
      %p107 = scmp.eq.s32.totalorder %s22, 0
      %p108 = por %p106, %p107
      %s109 = ssub.s32 %s23, %s35
      %s110 = ssub.s32 %s24, %s31
      %s111 = sor.u32 %s109, %s110
      %p112 = scmp.eq.s32.totalorder %s111, 0
      %s114 = sadd.s32 %s113, 1
      %s115 = scalar_select %p112, %s113, %s114
      %p118 = pneg %p112
      %p119 = scmp.eq.s32.totalorder %s16, 1
      %p120 = por %p118, %p119
      %p121 = scmp.ne.s32.totalorder %s113, %s116
      %p122 = scmp.eq.s32.totalorder %s16, 0
      %p123 = por %p121, %p122
      %p124 = scmp.ne.s32.totalorder %s113, %s116
      %p125 = scmp.eq.s32.totalorder %s21, 1
      %p126 = por %p124, %p125
      %p127 = scmp.ne.s32.totalorder %s116, %s117
      %p128 = scmp.eq.s32.totalorder %s21, 0
      %p129 = por %p127, %p128
      %p130 = scmp.ne.s32.totalorder %s116, %s117
      %p131 = scmp.eq.s32.totalorder %s22, 1
      %p132 = por %p130, %p131
      %p134 = scmp.ne.s32.totalorder %s117, %s133
      %p135 = scmp.eq.s32.totalorder %s22, 0
      %p136 = por %p134, %p135
      %p137 = scmp.le.s32.totalorder 1, %s16
      %p138 = scmp.lt.s32.totalorder %s16, 3
      %p139 = pnand %p137, %p138
      %p140 = pneg %p139
      // Predicated region
      $region9: #{tpu_custom_call.1} parent=5 // pred_check
        _
      $region10: #{tpu_custom_call.1} parent=5 // pred_check_branch
        %142 = sbr.rel (%p139) target = $region12
      $region11: #{tpu_custom_call.1} parent=5 // pred_region
        %s143 = ssub.s32 %s16, 1
        // Predicated region
        $region13: #{tpu_custom_call.1} parent=11 // pred_check
          %p144 = pneg %p75
        $region14: #{tpu_custom_call.1} parent=11 // pred_check_branch
          %146 = sbr.rel (%p144) target = $region16
        $region15: #{tpu_custom_call.1} parent=11 // pred_region
          %s148 = ssub.s32 128, 128
          %149 = vsyncadd [#allocation6], %s148
          %s151 = sshll.u32 [#allocation5], 4
          %s152 = int_to_ptr.vmem [resolvable:$true] %s151
          %154 = dma.hbm_to_vmem [thread:$0]  %s1, 128, %s152, [#allocation6]
        $region16: #{tpu_custom_call.1} parent=11 // pred_fallthru
          _
        // Predicated region
        $region17: #{tpu_custom_call.1} parent=11 // pred_check
          %p155 = pneg %p101
        $region18: #{tpu_custom_call.1} parent=11 // pred_check_branch
          %157 = sbr.rel (%p155) target = $region20
        $region19: #{tpu_custom_call.1} parent=11 // pred_region
          %s159 = ssub.s32 128, 128
          %160 = vsyncadd [#allocation6], %s159
          %s161 = smul.addr %s26, 128
          %s162 = scalar_lea.hbm %s2, %s161
          %s164 = sshll.u32 [#allocation7], 4
          %s165 = int_to_ptr.vmem [resolvable:$true] %s164
          %167 = dma.hbm_to_vmem [thread:$0]  %s162, 128, %s165, [#allocation6]
        $region20: #{tpu_custom_call.1} parent=11 // pred_fallthru
          _
      $region12: #{tpu_custom_call.1} parent=5 // pred_fallthru
        _
      %p168 = scmp.lt.s32.totalorder %s16, 2
      // Predicated region
      $region21: #{tpu_custom_call.1} parent=5 // pred_check
        %p169 = pneg %p168
      $region22: #{tpu_custom_call.1} parent=5 // pred_check_branch
        %171 = sbr.rel (%p169) target = $region24
      $region23: #{tpu_custom_call.1} parent=5 // pred_region
        // Predicated region
        $region25: #{tpu_custom_call.1} parent=23 // pred_check
          %p172 = pneg %p48
        $region26: #{tpu_custom_call.1} parent=23 // pred_check_branch
          %174 = sbr.rel (%p172) target = $region28
        $region27: #{tpu_custom_call.1} parent=23 // pred_region
          %s175 = sand.u32 %s38, 1
          %s176 = scalar_lea.sflag [#allocation3], %s175
          %s177 = sand.u32 %s38, 1
          %s178 = smul.addr %s177, 8
          %s179 = scalar_lea.vmem [#allocation2], %s178
          %s181 = ssub.s32 128, 128
          %182 = vsyncadd %s176, %s181
          %s183 = smul.addr %s23, 128
          %s184 = scalar_lea.hbm %s0, %s183
          %s186 = sshll.u32 %s179, 4
          %s187 = int_to_ptr.vmem [resolvable:$true] %s186
          %189 = dma.hbm_to_vmem [thread:$0]  %s184, 128, %s187, %s176
        $region28: #{tpu_custom_call.1} parent=23 // pred_fallthru
          _
      $region24: #{tpu_custom_call.1} parent=5 // pred_fallthru
        _
      %p190 = scmp.le.s32.totalorder 1, %s16
      %p191 = scmp.lt.s32.totalorder %s16, 3
      %p192 = pnand %p190, %p191
      %p193 = pneg %p192
      // Predicated region
      $region29: #{tpu_custom_call.1} parent=5 // pred_check
        _
      $region30: #{tpu_custom_call.1} parent=5 // pred_check_branch
        %195 = sbr.rel (%p192) target = $region32
      $region31: #{tpu_custom_call.1} parent=5 // pred_region
        %s196 = ssub.s32 %s16, 1
        %s197 = sand.u32 %s41, 1
        %s198 = scalar_lea.sflag [#allocation3], %s197
        %s199 = sand.u32 %s41, 1
        %s200 = smul.addr %s199, 8
        %s201 = scalar_lea.vmem [#allocation2], %s200
        // Predicated region
        $region33: #{tpu_custom_call.1} parent=31 // pred_check
          %p202 = pneg %p54
        $region34: #{tpu_custom_call.1} parent=31 // pred_check_branch
          %204 = sbr.rel (%p202) target = $region36
        $region35: #{tpu_custom_call.1} parent=31 // pred_region
          %205 = dma.done %s198, 128
        $region36: #{tpu_custom_call.1} parent=31 // pred_fallthru
          _
        // Predicated region
        $region37: #{tpu_custom_call.1} parent=31 // pred_check
          %p206 = pneg %p75
        $region38: #{tpu_custom_call.1} parent=31 // pred_check_branch
          %208 = sbr.rel (%p206) target = $region40
        $region39: #{tpu_custom_call.1} parent=31 // pred_region
          %209 = dma.done [#allocation6], 128
        $region40: #{tpu_custom_call.1} parent=31 // pred_fallthru
          _
        // Predicated region
        $region41: #{tpu_custom_call.1} parent=31 // pred_check
          %p210 = pneg %p101
        $region42: #{tpu_custom_call.1} parent=31 // pred_check_branch
          %212 = sbr.rel (%p210) target = $region44
        $region43: #{tpu_custom_call.1} parent=31 // pred_region
          %213 = dma.done [#allocation6], 128
        $region44: #{tpu_custom_call.1} parent=31 // pred_fallthru
          _
        %s214 = sand.u32 %s41, 1
        %s215 = scalar_lea.sflag [#allocation3], %s214
        %s216 = sand.u32 %s41, 1
        %s217 = smul.addr %s216, 8
        %s218 = scalar_lea.vmem [#allocation2], %s217
        %p219 = pneg %p54
        %p220 = pneg %p51
        %p221 = pneg %p75
        %p222 = pneg %p72
        %p223 = pneg %p101
        %p224 = pneg %p98
        %p225 = pneg %p129
        %p226 = pneg %p126
        %s227 = sand.u32 %s116, 1
        %s228 = scalar_lea.sflag [#allocation4], %s227
        %s229 = sand.u32 %s116, 1
        %s230 = smul.addr %s229, 8
        %s231 = scalar_lea.vmem [#allocation8], %s230
        %v232 = vld [vmem:[%s201] sm:$0xff]
        %v233 = vld [vmem:[#allocation5] sm:$0xff]
        %vm234 = vcmask 261120
        %v236 = vsel %vm234, %v232, 0
        %v239 = vsel %vm234, %v233, 0
        %241 = vmatprep.subr.mxu0 0.0
        %242 = vmatpush1.xpose.msra.mxu0 0.0
        %243 = vmatprep.subr.mxu0 0.0
        %244 = vmatpush1.xpose.msra.mxu0 0.0
        %245 = vmatprep.subr.mxu0 0.0
        %246 = vmatpush1.xpose.msra.mxu0 0.0
        %247 = vmatprep.subr.mxu0 0.0
        %248 = vmatpush1.xpose.msra.mxu0 0.0
        %249 = vmatprep.subr.mxu0 0.0
        %250 = vmatpush1.xpose.msra.mxu0 0.0
        %251 = vmatprep.subr.mxu0 0.0
        %252 = vmatpush1.xpose.msra.mxu0 0.0
        %253 = vmatprep.subr.mxu0 0.0
        %254 = vmatpush1.xpose.msra.mxu0 0.0
        %255 = vmatprep.subr.mxu0 0.0
        %256 = vmatpush1.xpose.msra.mxu0 0.0
        %257 = vmatprep.subr.mxu0 0.0
        %258 = vmatpush1.xpose.msra.mxu0 0.0
        %259 = vmatprep.subr.mxu0 0.0
        %260 = vmatpush1.xpose.msra.mxu0 0.0
        %261 = vmatprep.subr.mxu0 0.0
        %262 = vmatpush1.xpose.msra.mxu0 0.0
        %263 = vmatprep.subr.mxu0 0.0
        %264 = vmatpush1.xpose.msra.mxu0 0.0
        %265 = vmatprep.subr.mxu0 0.0
        %266 = vmatpush1.xpose.msra.mxu0 0.0
        %267 = vmatprep.subr.mxu0 0.0
        %268 = vmatpush1.xpose.msra.mxu0 0.0
        %269 = vmatprep.subr.mxu0 0.0
        %270 = vmatpush1.xpose.msra.mxu0 0.0
        %271 = vmatprep.subr.mxu0 0.0
        %272 = vmatpush1.xpose.msra.mxu0 %v239
        %273 = vmatprep.subr.mxu0 0.0
        %274 = vmatpush2.xpose.msra.mxu0 0.0
        %275 = vmatprep.subr.mxu0 0.0
        %276 = vmatpush2.xpose.msra.mxu0 0.0
        %277 = vmatprep.subr.mxu0 0.0
        %278 = vmatpush2.xpose.msra.mxu0 0.0
        %279 = vmatprep.subr.mxu0 0.0
        %280 = vmatpush2.xpose.msra.mxu0 0.0
        %281 = vmatprep.subr.mxu0 0.0
        %282 = vmatpush2.xpose.msra.mxu0 0.0
        %283 = vmatprep.subr.mxu0 0.0
        %284 = vmatpush2.xpose.msra.mxu0 0.0
        %285 = vmatprep.subr.mxu0 0.0
        %286 = vmatpush2.xpose.msra.mxu0 0.0
        %287 = vmatprep.subr.mxu0 0.0
        %288 = vmatpush2.xpose.msra.mxu0 0.0
        %289 = vmatprep.subr.mxu0 0.0
        %290 = vmatpush2.xpose.msra.mxu0 0.0
        %291 = vmatprep.subr.mxu0 0.0
        %292 = vmatpush2.xpose.msra.mxu0 0.0
        %293 = vmatprep.subr.mxu0 0.0
        %294 = vmatpush2.xpose.msra.mxu0 0.0
        %295 = vmatprep.subr.mxu0 0.0
        %296 = vmatpush2.xpose.msra.mxu0 0.0
        %297 = vmatprep.subr.mxu0 0.0
        %298 = vmatpush2.xpose.msra.mxu0 0.0
        %299 = vmatprep.subr.mxu0 0.0
        %300 = vmatpush2.xpose.msra.mxu0 0.0
        %301 = vmatprep.subr.mxu0 0.0
        %302 = vmatpush2.xpose.msra.mxu0 0.0
        %303 = vmatprep.subr.mxu0 0.0
        %304 = vmatpush2.xpose.msra.mxu0 0.0
        %305 = vmatprep.mubr.f32.mxu0 0.0
        %306 = vmatmul.mubr.f32.gmra.mxu0 %v236
        %v307 = vpop.f32.mrf.mxu0
        %v308 = vadd.f32 0.0, %v307
        %v309 = vpop.f32.mrf.mxu0
        %310 = vdwg.mxu0
        %v311 = vmul.f32 %v308, 2.0
        %v312 = vld [vmem:[#allocation7] sm:$0xff]
        %vm313 = vcmask 64512
        %v315 = vsel %vm313, %v311, 0
        %317 = vmatprep.subr.mxu0 0.0
        %318 = vmatpush1.msra.mxu0 0.0
        %319 = vmatprep.subr.mxu0 0.0
        %320 = vmatpush1.msra.mxu0 0.0
        %321 = vmatprep.subr.mxu0 0.0
        %322 = vmatpush1.msra.mxu0 0.0
        %323 = vmatprep.subr.mxu0 0.0
        %324 = vmatpush1.msra.mxu0 0.0
        %325 = vmatprep.subr.mxu0 0.0
        %326 = vmatpush1.msra.mxu0 0.0
        %327 = vmatprep.subr.mxu0 0.0
        %328 = vmatpush1.msra.mxu0 0.0
        %329 = vmatprep.subr.mxu0 0.0
        %330 = vmatpush1.msra.mxu0 0.0
        %331 = vmatprep.subr.mxu0 0.0
        %332 = vmatpush1.msra.mxu0 0.0
        %333 = vmatprep.subr.mxu0 0.0
        %334 = vmatpush1.msra.mxu0 0.0
        %335 = vmatprep.subr.mxu0 0.0
        %336 = vmatpush1.msra.mxu0 0.0
        %337 = vmatprep.subr.mxu0 0.0
        %338 = vmatpush1.msra.mxu0 0.0
        %339 = vmatprep.subr.mxu0 0.0
        %340 = vmatpush1.msra.mxu0 0.0
        %341 = vmatprep.subr.mxu0 0.0
        %342 = vmatpush1.msra.mxu0 0.0
        %343 = vmatprep.subr.mxu0 0.0
        %344 = vmatpush1.msra.mxu0 0.0
        %345 = vmatprep.subr.mxu0 0.0
        %346 = vmatpush1.msra.mxu0 0.0
        %347 = vmatprep.subr.mxu0 0.0
        %348 = vmatpush1.msra.mxu0 %v312
        %349 = vmatprep.subr.mxu0 0.0
        %350 = vmatpush2.msra.mxu0 0.0
        %351 = vmatprep.subr.mxu0 0.0
        %352 = vmatpush2.msra.mxu0 0.0
        %353 = vmatprep.subr.mxu0 0.0
        %354 = vmatpush2.msra.mxu0 0.0
        %355 = vmatprep.subr.mxu0 0.0
        %356 = vmatpush2.msra.mxu0 0.0
        %357 = vmatprep.subr.mxu0 0.0
        %358 = vmatpush2.msra.mxu0 0.0
        %359 = vmatprep.subr.mxu0 0.0
        %360 = vmatpush2.msra.mxu0 0.0
        %361 = vmatprep.subr.mxu0 0.0
        %362 = vmatpush2.msra.mxu0 0.0
        %363 = vmatprep.subr.mxu0 0.0
        %364 = vmatpush2.msra.mxu0 0.0
        %365 = vmatprep.subr.mxu0 0.0
        %366 = vmatpush2.msra.mxu0 0.0
        %367 = vmatprep.subr.mxu0 0.0
        %368 = vmatpush2.msra.mxu0 0.0
        %369 = vmatprep.subr.mxu0 0.0
        %370 = vmatpush2.msra.mxu0 0.0
        %371 = vmatprep.subr.mxu0 0.0
        %372 = vmatpush2.msra.mxu0 0.0
        %373 = vmatprep.subr.mxu0 0.0
        %374 = vmatpush2.msra.mxu0 0.0
        %375 = vmatprep.subr.mxu0 0.0
        %376 = vmatpush2.msra.mxu0 0.0
        %377 = vmatprep.subr.mxu0 0.0
        %378 = vmatpush2.msra.mxu0 0.0
        %379 = vmatprep.subr.mxu0 0.0
        %380 = vmatpush2.msra.mxu0 0.0
        %381 = vmatprep.mubr.f32.mxu0 0.0
        %382 = vmatmul.mubr.f32.gmra.mxu0 %v315
        %v383 = vpop.f32.mrf.mxu0
        %v384 = vadd.f32 0.0, %v383
        %v385 = vpop.f32.mrf.mxu0
        %386 = vdwg.mxu0
        %387 = vst.msk [vmem:[%s231] sm:$0xff] %vm234, %v384
        %s388 = sand.u32 %s116, 1
        %s389 = scalar_lea.sflag [#allocation4], %s388
        %s390 = sand.u32 %s116, 1
        %s391 = smul.addr %s390, 8
        %s392 = scalar_lea.vmem [#allocation8], %s391
        // Predicated region
        $region45: #{tpu_custom_call.1} parent=31 // pred_check
          %p393 = pneg %p126
        $region46: #{tpu_custom_call.1} parent=31 // pred_check_branch
          %395 = sbr.rel (%p393) target = $region48
        $region47: #{tpu_custom_call.1} parent=31 // pred_region
          %s397 = ssub.s32 128, 128
          %398 = vsyncadd %s389, %s397
          %s399 = sadd.s32 %s26, %s25
          %s400 = smul.addr %s399, 128
          %s401 = scalar_lea.hbm %s3, %s400
          %s403 = sshll.u32 %s392, 4
          %s404 = int_to_ptr.vmem [resolvable:$true] %s403
          %406 = dma.vmem_to_hbm [thread:$0]  %s404, 128, %s401, %s389
        $region48: #{tpu_custom_call.1} parent=31 // pred_fallthru
          _
      $region32: #{tpu_custom_call.1} parent=5 // pred_fallthru
        _
      %p407 = scmp.le.s32.totalorder 2, %s16
      // Predicated region
      $region49: #{tpu_custom_call.1} parent=5 // pred_check
        %p408 = pneg %p407
      $region50: #{tpu_custom_call.1} parent=5 // pred_check_branch
        %410 = sbr.rel (%p408) target = $region52
      $region51: #{tpu_custom_call.1} parent=5 // pred_region
        %s411 = ssub.s32 %s16, 2
        // Predicated region
        $region53: #{tpu_custom_call.1} parent=51 // pred_check
          %p412 = pneg %p132
        $region54: #{tpu_custom_call.1} parent=51 // pred_check_branch
          %414 = sbr.rel (%p412) target = $region56
        $region55: #{tpu_custom_call.1} parent=51 // pred_region
          %s415 = sand.u32 %s117, 1
          %s416 = scalar_lea.sflag [#allocation4], %s415
          %s417 = sand.u32 %s117, 1
          %s418 = smul.addr %s417, 8
          %s419 = scalar_lea.vmem [#allocation8], %s418
          %420 = dma.done %s416, 128
        $region56: #{tpu_custom_call.1} parent=51 // pred_fallthru
          _
      $region52: #{tpu_custom_call.1} parent=5 // pred_fallthru
        _
    $region6: #{tpu_custom_call.1} parent=1 // loop_footer
      %s20 = sadd.s32 1, %s16
    $region7: #{tpu_custom_call.1} parent=1 // loop_footer_branch
      %15 = sbr.rel target = $region3
    $region8: #{tpu_custom_call.1} parent=1 // loop_exit
      _
    %421 = vsyncpa [#allocation3], 1
    %s422 = scalar_lea.sflag [#allocation3], 1
    %423 = vsyncpa %s422, 1
    %424 = vsyncpa [#allocation6], 1
    %425 = vsyncpa [#allocation4], 1
    %s426 = scalar_lea.sflag [#allocation4], 1
    %427 = vsyncpa %s426, 1

</llo_original>
